<compile_context>
chip_gen: v7x
topology: tpu7x:2x2x1
jax: 0.10.0
libtpu: 0.0.40
codegen_flags: <defaults>
</compile_context>

<pallas_src>
import jax
import jax.numpy as jnp
from jax.experimental import pallas as pl
from jax.experimental.pallas import tpu as pltpu


LANES = 128  # TPU vreg lane width; all feature dims are zero-padded to this


def _make_rnn_kernel(T, B):
    """Build the fused whole-sequence RNN kernel for static (T, B)."""

    def kernel(x_ref, h0_ref, wx_ref, wh_ref, b_ref, out_ref):
        # x_ref : (T*B, 128)  time-major flattened inputs (zero-padded lanes)
        # h0_ref: (B, 128)    initial hidden (zero-padded lanes)
        # wx_ref: (128, 128)  [Wxh | Wxo] fused input->{hidden,output} weights
        # wh_ref: (128, 128)  [Whh | Who] fused hidden->{hidden,output} weights
        #                     (rows >= H are exactly zero)
        # b_ref : (1, 128)    fused bias (lanes >= H+O are exactly zero)
        # out_ref:(T*B, 128)  per-step tanh slab [hidden | output | 0]

        # 1) Hoisted input projection: one big MXU matmul + bias for all T
        #    steps at once, written straight into the output slab. It has no
        #    dependence on the recurrence, so it sits off the serial chain.
        out_ref[...] = (
            jnp.dot(x_ref[...], wx_ref[...], preferred_element_type=jnp.float32)
            + b_ref[...]
        )

        # 2) Serial recurrence: only h @ Wh + add + tanh per step. Wh is loaded
        #    once; h lives in vregs across the (statically unrolled) loop.
        wh = wh_ref[...]
        h = h0_ref[...]
        for t in range(T):                      # T static -> full unroll
            rows = pl.ds(t * B, B)              # static, sublane-aligned start
            act = jnp.tanh(
                out_ref[rows, :]
                + jnp.dot(h, wh, preferred_element_type=jnp.float32)
            )
            out_ref[rows, :] = act              # lane-dense, unmasked store
            h = act                             # carry hidden (padded lanes
                                                #  killed by zero Wh rows)

    return kernel


def rnn_forward_seq(x_seq, h0, params):
    """Run T RNN steps in one fused kernel.

    x_seq: (T, B, I) time-major inputs; h0: (B, H) initial hidden.
    Returns (outputs, new_hidden):
      outputs    (T, B, O) = tanh(i2o(combined)) per step (module's return),
      new_hidden (B, H)    = final hidden state (module's self.hidden).
    """
    T, B, I = x_seq.shape
    H = params["hidden_size"]
    O = params["output_size"]
    KP = LANES
    NP = LANES

    # Lane-pad and flatten time*batch into the matmul M dimension (free in XLA).
    x2d = jnp.pad(x_seq, ((0, 0), (0, 0), (0, KP - I))).reshape(T * B, KP)
    h0_pad = jnp.pad(h0, ((0, 0), (0, KP - H)))

    vmem = pl.BlockSpec(memory_space=pltpu.MemorySpace.VMEM)

    out2d = pl.pallas_call(
        _make_rnn_kernel(T, B),
        out_shape=jax.ShapeDtypeStruct((T * B, NP), jnp.float32),
        in_specs=[vmem, vmem, vmem, vmem, vmem],
        out_specs=vmem,
    )(x2d, h0_pad, params["wx_pad"], params["wh_pad"], params["b_pad"])

    out = out2d.reshape(T, B, NP)
    outputs = out[:, :, H:H + O]      # (T, B, O): per-step tanh(i2o(combined))
    new_hidden = out[-1, :, :H]       # (B, H): final hidden state
    return outputs, new_hidden


def init_params(key, input_size, hidden_size, output_size):
    """nn.Linear-style init: U(-1/sqrt(fan_in), 1/sqrt(fan_in)).
    The two Linear heads are fused along N and split/transposed along K, then
    zero-padded into 128x128 slabs for the kernel."""
    fan_in = input_size + hidden_size
    bound = 1.0 / jnp.sqrt(jnp.float32(fan_in))
    k = jax.random.split(key, 4)

    w_i2h = jax.random.uniform(k[0], (hidden_size, fan_in), jnp.float32, -bound, bound)
    b_i2h = jax.random.uniform(k[1], (hidden_size,), jnp.float32, -bound, bound)
    w_i2o = jax.random.uniform(k[2], (output_size, fan_in), jnp.float32, -bound, bound)
    b_i2o = jax.random.uniform(k[3], (output_size,), jnp.float32, -bound, bound)

    N = hidden_size + output_size
    w_full = jnp.concatenate([w_i2h, w_i2o], axis=0)   # (H+O, I+H)  fused heads
    wx = w_full[:, :input_size].T                      # (I, H+O)
    wh = w_full[:, input_size:].T                      # (H, H+O)
    b = jnp.concatenate([b_i2h, b_i2o], axis=0)        # (H+O,)

    # Padding beyond H rows (Wh) and beyond H+O lanes (bias) MUST stay zero:
    # it is what keeps the carried 128-lane slab's non-hidden lanes inert.
    wx_pad = jnp.zeros((LANES, LANES), jnp.float32).at[:input_size, :N].set(wx)
    wh_pad = jnp.zeros((LANES, LANES), jnp.float32).at[:hidden_size, :N].set(wh)
    b_pad = jnp.zeros((1, LANES), jnp.float32).at[0, :N].set(b)

    return {
        "hidden_size": hidden_size,
        "output_size": output_size,
        "wx_pad": wx_pad, "wh_pad": wh_pad, "b_pad": b_pad,
        # torch-layout copies for the pure-JAX reference
        "w_i2h": w_i2h, "b_i2h": b_i2h, "w_i2o": w_i2o, "b_i2o": b_i2o,
    }


def reference_forward_seq(x_seq, h0, params):
    """Pure-JAX reference mirroring the PyTorch module stepped T times."""
    def step(h, x_t):
        combined = jnp.concatenate([x_t, h], axis=1)
        new_h = jnp.tanh(combined @ params["w_i2h"].T + params["b_i2h"])
        out = jnp.tanh(combined @ params["w_i2o"].T + params["b_i2o"])
        return new_h, out
    h_final, outs = jax.lax.scan(step, h0, x_seq)
    return outs, h_final


if __name__ == "__main__":
    input_size, hidden_size, output_size = 16, 32, 8
    T, B = 8, 32  # 8 timesteps, 32 independent sequences (4 f32 sublane groups)

    key = jax.random.PRNGKey(0)
    kx, kp = jax.random.split(key)
    x_seq = jax.random.normal(kx, (T, B, input_size), jnp.float32)
    h0 = jnp.zeros((B, hidden_size), jnp.float32)  # initHidden() per sequence
    params = init_params(kp, input_size, hidden_size, output_size)

    outputs, new_hidden = rnn_forward_seq(x_seq, h0, params)
    outputs = jax.block_until_ready(outputs)
    new_hidden = jax.block_until_ready(new_hidden)

    ref_out, ref_hidden = reference_forward_seq(x_seq, h0, params)
    assert jnp.allclose(outputs, ref_out, atol=1e-5, rtol=1e-5), "output mismatch"
    assert jnp.allclose(new_hidden, ref_hidden, atol=1e-5, rtol=1e-5), "hidden mismatch"

    # TODO(synk): nn.LogSoftmax is constructed by the module but never applied
    # in forward(), so it is intentionally not part of the kernel.
    print("KERNEL_OK")
</pallas_src>

<mosaic_0001>
module attributes {stable_mosaic.version = 11 : i64} {
  func.func @kernel(%arg0: memref<256x128xf32, #tpu.memory_space<vmem>>, %arg1: memref<32x128xf32, #tpu.memory_space<vmem>>, %arg2: memref<128x128xf32, #tpu.memory_space<vmem>>, %arg3: memref<128x128xf32, #tpu.memory_space<vmem>>, %arg4: memref<1x128xf32, #tpu.memory_space<vmem>>, %arg5: memref<256x128xf32, #tpu.memory_space<vmem>>) attributes {dimension_semantics = [], scalar_prefetch = 0 : i64, scratch_operands = 0 : i64, tpu.core_type = #tpu.core_type<tc>} {
    %c0 = arith.constant 0 : index
    %c0_0 = arith.constant 0 : index
    %0 = vector.load %arg0[%c0, %c0_0] : memref<256x128xf32, #tpu.memory_space<vmem>>, vector<256x128xf32>
    %c0_1 = arith.constant 0 : index
    %c0_2 = arith.constant 0 : index
    %1 = vector.load %arg2[%c0_1, %c0_2] : memref<128x128xf32, #tpu.memory_space<vmem>>, vector<128x128xf32>
    %cst = arith.constant dense<0.000000e+00> : vector<256x128xf32>
    %2 = tpu.matmul %0, %1, %cst {dimension_numbers = #tpu.dot_dimension_numbers<[1], [0], [0], [1], [0, 0, 1, 1], [], []>} : vector<256x128xf32>, vector<128x128xf32>, vector<256x128xf32> -> vector<256x128xf32>
    %c0_3 = arith.constant 0 : index
    %c0_4 = arith.constant 0 : index
    %3 = vector.load %arg4[%c0_3, %c0_4] : memref<1x128xf32, #tpu.memory_space<vmem>>, vector<1x128xf32>
    %4 = vector.broadcast %3 : vector<1x128xf32> to vector<256x128xf32>
    %5 = arith.addf %2, %4 : vector<256x128xf32>
    %c0_5 = arith.constant 0 : index
    %c0_6 = arith.constant 0 : index
    %6 = vector.load %arg5[%c0_5, %c0_6] : memref<256x128xf32, #tpu.memory_space<vmem>>, vector<256x128xf32>
    tpu.vector_store %arg5[%c0_5, %c0_6], %5 {strides = array<i32>} : memref<256x128xf32, #tpu.memory_space<vmem>>, vector<256x128xf32>,
    %c0_7 = arith.constant 0 : index
    %c0_8 = arith.constant 0 : index
    %7 = vector.load %arg3[%c0_7, %c0_8] : memref<128x128xf32, #tpu.memory_space<vmem>>, vector<128x128xf32>
    %c0_9 = arith.constant 0 : index
    %c0_10 = arith.constant 0 : index
    %8 = vector.load %arg1[%c0_9, %c0_10] : memref<32x128xf32, #tpu.memory_space<vmem>>, vector<32x128xf32>
    %c0_11 = arith.constant 0 : index
    %c0_12 = arith.constant 0 : index
    %9 = vector.load %arg5[%c0_11, %c0_12] : memref<256x128xf32, #tpu.memory_space<vmem>>, vector<32x128xf32>
    %cst_13 = arith.constant dense<0.000000e+00> : vector<32x128xf32>
    %10 = tpu.matmul %8, %7, %cst_13 {dimension_numbers = #tpu.dot_dimension_numbers<[1], [0], [0], [1], [0, 0, 1, 1], [], []>} : vector<32x128xf32>, vector<128x128xf32>, vector<32x128xf32> -> vector<32x128xf32>
    %11 = arith.addf %9, %10 : vector<32x128xf32>
    %12 = math.tanh %11 : vector<32x128xf32>
    %c0_14 = arith.constant 0 : index
    %c0_15 = arith.constant 0 : index
    %13 = vector.load %arg5[%c0_14, %c0_15] : memref<256x128xf32, #tpu.memory_space<vmem>>, vector<32x128xf32>
    tpu.vector_store %arg5[%c0_14, %c0_15], %12 {strides = array<i32>} : memref<256x128xf32, #tpu.memory_space<vmem>>, vector<32x128xf32>,
    %c32 = arith.constant 32 : index
    %c0_16 = arith.constant 0 : index
    %14 = vector.load %arg5[%c32, %c0_16] : memref<256x128xf32, #tpu.memory_space<vmem>>, vector<32x128xf32>
    %cst_17 = arith.constant dense<0.000000e+00> : vector<32x128xf32>
    %15 = tpu.matmul %12, %7, %cst_17 {dimension_numbers = #tpu.dot_dimension_numbers<[1], [0], [0], [1], [0, 0, 1, 1], [], []>} : vector<32x128xf32>, vector<128x128xf32>, vector<32x128xf32> -> vector<32x128xf32>
    %16 = arith.addf %14, %15 : vector<32x128xf32>
    %17 = math.tanh %16 : vector<32x128xf32>
    %c32_18 = arith.constant 32 : index
    %c0_19 = arith.constant 0 : index
    %18 = vector.load %arg5[%c32_18, %c0_19] : memref<256x128xf32, #tpu.memory_space<vmem>>, vector<32x128xf32>
    tpu.vector_store %arg5[%c32_18, %c0_19], %17 {strides = array<i32>} : memref<256x128xf32, #tpu.memory_space<vmem>>, vector<32x128xf32>,
    %c64 = arith.constant 64 : index
    %c0_20 = arith.constant 0 : index
    %19 = vector.load %arg5[%c64, %c0_20] : memref<256x128xf32, #tpu.memory_space<vmem>>, vector<32x128xf32>
    %cst_21 = arith.constant dense<0.000000e+00> : vector<32x128xf32>
    %20 = tpu.matmul %17, %7, %cst_21 {dimension_numbers = #tpu.dot_dimension_numbers<[1], [0], [0], [1], [0, 0, 1, 1], [], []>} : vector<32x128xf32>, vector<128x128xf32>, vector<32x128xf32> -> vector<32x128xf32>
    %21 = arith.addf %19, %20 : vector<32x128xf32>
    %22 = math.tanh %21 : vector<32x128xf32>
    %c64_22 = arith.constant 64 : index
    %c0_23 = arith.constant 0 : index
    %23 = vector.load %arg5[%c64_22, %c0_23] : memref<256x128xf32, #tpu.memory_space<vmem>>, vector<32x128xf32>
    tpu.vector_store %arg5[%c64_22, %c0_23], %22 {strides = array<i32>} : memref<256x128xf32, #tpu.memory_space<vmem>>, vector<32x128xf32>,
    %c96 = arith.constant 96 : index
    %c0_24 = arith.constant 0 : index
    %24 = vector.load %arg5[%c96, %c0_24] : memref<256x128xf32, #tpu.memory_space<vmem>>, vector<32x128xf32>
    %cst_25 = arith.constant dense<0.000000e+00> : vector<32x128xf32>
    %25 = tpu.matmul %22, %7, %cst_25 {dimension_numbers = #tpu.dot_dimension_numbers<[1], [0], [0], [1], [0, 0, 1, 1], [], []>} : vector<32x128xf32>, vector<128x128xf32>, vector<32x128xf32> -> vector<32x128xf32>
    %26 = arith.addf %24, %25 : vector<32x128xf32>
    %27 = math.tanh %26 : vector<32x128xf32>
    %c96_26 = arith.constant 96 : index
    %c0_27 = arith.constant 0 : index
    %28 = vector.load %arg5[%c96_26, %c0_27] : memref<256x128xf32, #tpu.memory_space<vmem>>, vector<32x128xf32>
    tpu.vector_store %arg5[%c96_26, %c0_27], %27 {strides = array<i32>} : memref<256x128xf32, #tpu.memory_space<vmem>>, vector<32x128xf32>,
    %c128 = arith.constant 128 : index
    %c0_28 = arith.constant 0 : index
    %29 = vector.load %arg5[%c128, %c0_28] : memref<256x128xf32, #tpu.memory_space<vmem>>, vector<32x128xf32>
    %cst_29 = arith.constant dense<0.000000e+00> : vector<32x128xf32>
    %30 = tpu.matmul %27, %7, %cst_29 {dimension_numbers = #tpu.dot_dimension_numbers<[1], [0], [0], [1], [0, 0, 1, 1], [], []>} : vector<32x128xf32>, vector<128x128xf32>, vector<32x128xf32> -> vector<32x128xf32>
    %31 = arith.addf %29, %30 : vector<32x128xf32>
    %32 = math.tanh %31 : vector<32x128xf32>
    %c128_30 = arith.constant 128 : index
    %c0_31 = arith.constant 0 : index
    %33 = vector.load %arg5[%c128_30, %c0_31] : memref<256x128xf32, #tpu.memory_space<vmem>>, vector<32x128xf32>
    tpu.vector_store %arg5[%c128_30, %c0_31], %32 {strides = array<i32>} : memref<256x128xf32, #tpu.memory_space<vmem>>, vector<32x128xf32>,
    %c160 = arith.constant 160 : index
    %c0_32 = arith.constant 0 : index
    %34 = vector.load %arg5[%c160, %c0_32] : memref<256x128xf32, #tpu.memory_space<vmem>>, vector<32x128xf32>
    %cst_33 = arith.constant dense<0.000000e+00> : vector<32x128xf32>
    %35 = tpu.matmul %32, %7, %cst_33 {dimension_numbers = #tpu.dot_dimension_numbers<[1], [0], [0], [1], [0, 0, 1, 1], [], []>} : vector<32x128xf32>, vector<128x128xf32>, vector<32x128xf32> -> vector<32x128xf32>
    %36 = arith.addf %34, %35 : vector<32x128xf32>
    %37 = math.tanh %36 : vector<32x128xf32>
    %c160_34 = arith.constant 160 : index
    %c0_35 = arith.constant 0 : index
    %38 = vector.load %arg5[%c160_34, %c0_35] : memref<256x128xf32, #tpu.memory_space<vmem>>, vector<32x128xf32>
    tpu.vector_store %arg5[%c160_34, %c0_35], %37 {strides = array<i32>} : memref<256x128xf32, #tpu.memory_space<vmem>>, vector<32x128xf32>,
    %c192 = arith.constant 192 : index
    %c0_36 = arith.constant 0 : index
    %39 = vector.load %arg5[%c192, %c0_36] : memref<256x128xf32, #tpu.memory_space<vmem>>, vector<32x128xf32>
    %cst_37 = arith.constant dense<0.000000e+00> : vector<32x128xf32>
    %40 = tpu.matmul %37, %7, %cst_37 {dimension_numbers = #tpu.dot_dimension_numbers<[1], [0], [0], [1], [0, 0, 1, 1], [], []>} : vector<32x128xf32>, vector<128x128xf32>, vector<32x128xf32> -> vector<32x128xf32>
    %41 = arith.addf %39, %40 : vector<32x128xf32>
    %42 = math.tanh %41 : vector<32x128xf32>
    %c192_38 = arith.constant 192 : index
    %c0_39 = arith.constant 0 : index
    %43 = vector.load %arg5[%c192_38, %c0_39] : memref<256x128xf32, #tpu.memory_space<vmem>>, vector<32x128xf32>
    tpu.vector_store %arg5[%c192_38, %c0_39], %42 {strides = array<i32>} : memref<256x128xf32, #tpu.memory_space<vmem>>, vector<32x128xf32>,
    %c224 = arith.constant 224 : index
    %c0_40 = arith.constant 0 : index
    %44 = vector.load %arg5[%c224, %c0_40] : memref<256x128xf32, #tpu.memory_space<vmem>>, vector<32x128xf32>
    %cst_41 = arith.constant dense<0.000000e+00> : vector<32x128xf32>
    %45 = tpu.matmul %42, %7, %cst_41 {dimension_numbers = #tpu.dot_dimension_numbers<[1], [0], [0], [1], [0, 0, 1, 1], [], []>} : vector<32x128xf32>, vector<128x128xf32>, vector<32x128xf32> -> vector<32x128xf32>
    %46 = arith.addf %44, %45 : vector<32x128xf32>
    %47 = math.tanh %46 : vector<32x128xf32>
    %c224_42 = arith.constant 224 : index
    %c0_43 = arith.constant 0 : index
    %48 = vector.load %arg5[%c224_42, %c0_43] : memref<256x128xf32, #tpu.memory_space<vmem>>, vector<32x128xf32>
    tpu.vector_store %arg5[%c224_42, %c0_43], %47 {strides = array<i32>} : memref<256x128xf32, #tpu.memory_space<vmem>>, vector<32x128xf32>,
    return
  }
}

</mosaic_0001>

<llo_original>
// kernel: tpu_custom_call.1
$region0: #{tpu_custom_call.1}
  #allocation0 [shape = 'u32[]', space=smem, size = 0x4, offset = 0x4, fixed_abs, tag = 'smem constant byte address 0x4 - core index']
  #allocation1 [shape = 'u32[144,128]{1,0:T(1,128)}', space=vmem, size = 0x12000, scoped, tag = 'internal scratch']
  %s0 = inlined_call_operand.hbm [shape: f32[256,128], index: 0, kind: input, shape index: {}]
  %s1 = inlined_call_operand.hbm [shape: f32[32,128], index: 1, kind: input, shape index: {}]
  %s2 = inlined_call_operand.hbm [shape: f32[128,128], index: 2, kind: input, shape index: {}]
  %s3 = inlined_call_operand.hbm [shape: f32[128,128], index: 3, kind: input, shape index: {}]
  %s4 = inlined_call_operand.vmem [shape: f32[1,128], index: 4, kind: input, shape index: {}]
  %s5 = inlined_call_operand.hbm [shape: f32[256,128], index: 5, kind: output, shape index: {}]
  %s6 = sld [smem:[#allocation0]]
  $region46: #{tpu_custom_call.1} parent=0
    _
  %s8 = ssub.s32 1, %s6
  %s9 = scalar_select 0, %s8, %s6
  $region1: #{tpu_custom_call.1} parent=0
    #allocation2 [shape = 'u8[131072]{0}', space=vmem, size = 0x20000, scoped, tag = 'input window, operand 0, single buffered']
    #allocation3 [shape = 's32[1]{0}', space=sflag, size = 0x4, scoped, tag = 'scoped memory for tpu_custom_call.1']
    #allocation4 [shape = 's32[1]{0}', space=sflag, size = 0x4, scoped, tag = 'scoped memory for tpu_custom_call.1']
    #allocation5 [shape = 'u8[16384]{0}', space=vmem, size = 0x4000, scoped, tag = 'input window, operand 1, single buffered']
    #allocation6 [shape = 's32[1]{0}', space=sflag, size = 0x4, scoped, tag = 'scoped memory for tpu_custom_call.1']
    #allocation7 [shape = 'u8[65536]{0}', space=vmem, size = 0x10000, scoped, tag = 'input window, operand 2, single buffered']
    #allocation8 [shape = 'u8[65536]{0}', space=vmem, size = 0x10000, scoped, tag = 'input window, operand 3, single buffered']
    #allocation9 [shape = 's32[1]{0}', space=sflag, size = 0x4, scoped, tag = 'scoped memory for tpu_custom_call.1']
    #allocation10 [shape = 'u8[131072]{0}', space=vmem, size = 0x20000, scoped, tag = 'output window, operand 0, single buffered']
    %10 = vsyncpa [#allocation3], 0
    %11 = vsyncpa [#allocation6], 0
    %12 = vsyncpa [#allocation9], 0
    %13 = vsyncpa [#allocation4], 0
    // Predicated region
    $region2: #{tpu_custom_call.1} parent=1 // pred_check
      _
    $region3: #{tpu_custom_call.1} parent=1 // pred_check_branch
      %15 = sbr.rel (0) target = $region5
    $region4: #{tpu_custom_call.1} parent=1 // pred_region
      %s17 = ssub.s32 4096, 4096
      %18 = vsyncadd [#allocation3], %s17
      %s19 = sshll.u32 [#allocation2], 4
      %s20 = int_to_ptr.vmem [resolvable:$true] %s19
      %25 = dma.hbm_to_vmem [thread:$0]  %s0, 4096, %s20, [#allocation3], 128, 128, 8
    $region5: #{tpu_custom_call.1} parent=1 // pred_fallthru
      _
    // Predicated region
    $region6: #{tpu_custom_call.1} parent=1 // pred_check
      _
    $region7: #{tpu_custom_call.1} parent=1 // pred_check_branch
      %27 = sbr.rel (0) target = $region9
    $region8: #{tpu_custom_call.1} parent=1 // pred_region
      %s29 = ssub.s32 512, 512
      %30 = vsyncadd [#allocation6], %s29
      %s31 = sshll.u32 [#allocation5], 4
      %s32 = int_to_ptr.vmem [resolvable:$true] %s31
      %37 = dma.hbm_to_vmem [thread:$0]  %s1, 512, %s32, [#allocation6], 128, 128, 8
    $region9: #{tpu_custom_call.1} parent=1 // pred_fallthru
      _
    // Predicated region
    $region10: #{tpu_custom_call.1} parent=1 // pred_check
      _
    $region11: #{tpu_custom_call.1} parent=1 // pred_check_branch
      %39 = sbr.rel (0) target = $region13
    $region12: #{tpu_custom_call.1} parent=1 // pred_region
      %s41 = ssub.s32 2048, 2048
      %42 = vsyncadd [#allocation6], %s41
      %s43 = sshll.u32 [#allocation7], 4
      %s44 = int_to_ptr.vmem [resolvable:$true] %s43
      %49 = dma.hbm_to_vmem [thread:$0]  %s2, 2048, %s44, [#allocation6], 128, 128, 8
    $region13: #{tpu_custom_call.1} parent=1 // pred_fallthru
      _
    // Predicated region
    $region14: #{tpu_custom_call.1} parent=1 // pred_check
      _
    $region15: #{tpu_custom_call.1} parent=1 // pred_check_branch
      %51 = sbr.rel (0) target = $region17
    $region16: #{tpu_custom_call.1} parent=1 // pred_region
      %s53 = ssub.s32 2048, 2048
      %54 = vsyncadd [#allocation9], %s53
      %s55 = sshll.u32 [#allocation8], 4
      %s56 = int_to_ptr.vmem [resolvable:$true] %s55
      %61 = dma.hbm_to_vmem [thread:$0]  %s3, 2048, %s56, [#allocation9], 128, 128, 8
    $region17: #{tpu_custom_call.1} parent=1 // pred_fallthru
      _
    // Predicated region
    $region18: #{tpu_custom_call.1} parent=1 // pred_check
      _
    $region19: #{tpu_custom_call.1} parent=1 // pred_check_branch
      %63 = sbr.rel (0) target = $region21
    $region20: #{tpu_custom_call.1} parent=1 // pred_region
      _
    $region21: #{tpu_custom_call.1} parent=1 // pred_fallthru
      _
    // Predicated region
    $region22: #{tpu_custom_call.1} parent=1 // pred_check
      _
    $region23: #{tpu_custom_call.1} parent=1 // pred_check_branch
      %65 = sbr.rel (0) target = $region25
    $region24: #{tpu_custom_call.1} parent=1 // pred_region
      %66 = dma.done [#allocation3], 4096
    $region25: #{tpu_custom_call.1} parent=1 // pred_fallthru
      _
    // Predicated region
    $region26: #{tpu_custom_call.1} parent=1 // pred_check
      _
    $region27: #{tpu_custom_call.1} parent=1 // pred_check_branch
      %68 = sbr.rel (0) target = $region29
    $region28: #{tpu_custom_call.1} parent=1 // pred_region
      %69 = dma.done [#allocation6], 512
    $region29: #{tpu_custom_call.1} parent=1 // pred_fallthru
      _
    // Predicated region
    $region30: #{tpu_custom_call.1} parent=1 // pred_check
      _
    $region31: #{tpu_custom_call.1} parent=1 // pred_check_branch
      %71 = sbr.rel (0) target = $region33
    $region32: #{tpu_custom_call.1} parent=1 // pred_region
      %72 = dma.done [#allocation6], 2048
    $region33: #{tpu_custom_call.1} parent=1 // pred_fallthru
      _
    // Predicated region
    $region34: #{tpu_custom_call.1} parent=1 // pred_check
      _
    $region35: #{tpu_custom_call.1} parent=1 // pred_check_branch
      %74 = sbr.rel (0) target = $region37
    $region36: #{tpu_custom_call.1} parent=1 // pred_region
      %75 = dma.done [#allocation9], 2048
    $region37: #{tpu_custom_call.1} parent=1 // pred_fallthru
      _
    %v76 = vld [vmem:[#allocation2] sm:$0xff]
    %v77 = vld [vmem:[#allocation2 + $0x8] sm:$0xff]
    %v78 = vld [vmem:[#allocation2 + $0x10] sm:$0xff]
    %v79 = vld [vmem:[#allocation2 + $0x18] sm:$0xff]
    %v80 = vld [vmem:[#allocation2 + $0x20] sm:$0xff]
    %v81 = vld [vmem:[#allocation2 + $0x28] sm:$0xff]
    %v82 = vld [vmem:[#allocation2 + $0x30] sm:$0xff]
    %v83 = vld [vmem:[#allocation2 + $0x38] sm:$0xff]
    %v84 = vld [vmem:[#allocation2 + $0x40] sm:$0xff]
    %v85 = vld [vmem:[#allocation2 + $0x48] sm:$0xff]
    %v86 = vld [vmem:[#allocation2 + $0x50] sm:$0xff]
    %v87 = vld [vmem:[#allocation2 + $0x58] sm:$0xff]
    %v88 = vld [vmem:[#allocation2 + $0x60] sm:$0xff]
    %v89 = vld [vmem:[#allocation2 + $0x68] sm:$0xff]
    %v90 = vld [vmem:[#allocation2 + $0x70] sm:$0xff]
    %v91 = vld [vmem:[#allocation2 + $0x78] sm:$0xff]
    %v92 = vld [vmem:[#allocation2 + $0x80] sm:$0xff]
    %v93 = vld [vmem:[#allocation2 + $0x88] sm:$0xff]
    %v94 = vld [vmem:[#allocation2 + $0x90] sm:$0xff]
    %v95 = vld [vmem:[#allocation2 + $0x98] sm:$0xff]
    %v96 = vld [vmem:[#allocation2 + $0xa0] sm:$0xff]
    %v97 = vld [vmem:[#allocation2 + $0xa8] sm:$0xff]
    %v98 = vld [vmem:[#allocation2 + $0xb0] sm:$0xff]
    %v99 = vld [vmem:[#allocation2 + $0xb8] sm:$0xff]
    %v100 = vld [vmem:[#allocation2 + $0xc0] sm:$0xff]
    %v101 = vld [vmem:[#allocation2 + $0xc8] sm:$0xff]
    %v102 = vld [vmem:[#allocation2 + $0xd0] sm:$0xff]
    %v103 = vld [vmem:[#allocation2 + $0xd8] sm:$0xff]
    %v104 = vld [vmem:[#allocation2 + $0xe0] sm:$0xff]
    %v105 = vld [vmem:[#allocation2 + $0xe8] sm:$0xff]
    %v106 = vld [vmem:[#allocation2 + $0xf0] sm:$0xff]
    %v107 = vld [vmem:[#allocation2 + $0xf8] sm:$0xff]
    %v108 = vld [vmem:[#allocation7] sm:$0xff]
    %v109 = vld [vmem:[#allocation7 + $0x8] sm:$0xff]
    %v110 = vld [vmem:[#allocation7 + $0x10] sm:$0xff]
    %v111 = vld [vmem:[#allocation7 + $0x18] sm:$0xff]
    %v112 = vld [vmem:[#allocation7 + $0x20] sm:$0xff]
    %v113 = vld [vmem:[#allocation7 + $0x28] sm:$0xff]
    %v114 = vld [vmem:[#allocation7 + $0x30] sm:$0xff]
    %v115 = vld [vmem:[#allocation7 + $0x38] sm:$0xff]
    %v116 = vld [vmem:[#allocation7 + $0x40] sm:$0xff]
    %v117 = vld [vmem:[#allocation7 + $0x48] sm:$0xff]
    %v118 = vld [vmem:[#allocation7 + $0x50] sm:$0xff]
    %v119 = vld [vmem:[#allocation7 + $0x58] sm:$0xff]
    %v120 = vld [vmem:[#allocation7 + $0x60] sm:$0xff]
    %v121 = vld [vmem:[#allocation7 + $0x68] sm:$0xff]
    %v122 = vld [vmem:[#allocation7 + $0x70] sm:$0xff]
    %v123 = vld [vmem:[#allocation7 + $0x78] sm:$0xff]
    %v124 = vld [vmem:[%s4] sm:$0x1]
    %v126 = vlaneseq
    %v127 = vshrl.u32 %v126, 7
    %v128 = vsub.s32 0, %v127
    %v129 = vrot.slane %v124, %v128
    %131 = vmatprep.subr.mxu0 0.0
    %132 = vmatpush1.msra.mxu0 %v108
    %133 = vmatprep.subr.mxu0 0.0
    %134 = vmatpush1.msra.mxu0 %v109
    %135 = vmatprep.subr.mxu0 0.0
    %136 = vmatpush1.msra.mxu0 %v110
    %137 = vmatprep.subr.mxu0 0.0
    %138 = vmatpush1.msra.mxu0 %v111
    %139 = vmatprep.subr.mxu0 0.0
    %140 = vmatpush1.msra.mxu0 %v112
    %141 = vmatprep.subr.mxu0 0.0
    %142 = vmatpush1.msra.mxu0 %v113
    %143 = vmatprep.subr.mxu0 0.0
    %144 = vmatpush1.msra.mxu0 %v114
    %145 = vmatprep.subr.mxu0 0.0
    %146 = vmatpush1.msra.mxu0 %v115
    %147 = vmatprep.subr.mxu0 0.0
    %148 = vmatpush1.msra.mxu0 %v116
    %149 = vmatprep.subr.mxu0 0.0
    %150 = vmatpush1.msra.mxu0 %v117
    %151 = vmatprep.subr.mxu0 0.0
    %152 = vmatpush1.msra.mxu0 %v118
    %153 = vmatprep.subr.mxu0 0.0
    %154 = vmatpush1.msra.mxu0 %v119
    %155 = vmatprep.subr.mxu0 0.0
    %156 = vmatpush1.msra.mxu0 %v120
    %157 = vmatprep.subr.mxu0 0.0
    %158 = vmatpush1.msra.mxu0 %v121
    %159 = vmatprep.subr.mxu0 0.0
    %160 = vmatpush1.msra.mxu0 %v122
    %161 = vmatprep.subr.mxu0 0.0
    %162 = vmatpush1.msra.mxu0 %v123
    %163 = vmatprep.subr.mxu0 0.0
    %164 = vmatpush1.msra.mxu0 0.0
    %165 = vmatprep.subr.mxu0 0.0
    %166 = vmatpush1.msra.mxu0 0.0
    %167 = vmatprep.subr.mxu0 0.0
    %168 = vmatpush1.msra.mxu0 0.0
    %169 = vmatprep.subr.mxu0 0.0
    %170 = vmatpush1.msra.mxu0 0.0
    %171 = vmatprep.subr.mxu0 0.0
    %172 = vmatpush1.msra.mxu0 0.0
    %173 = vmatprep.subr.mxu0 0.0
    %174 = vmatpush1.msra.mxu0 0.0
    %175 = vmatprep.subr.mxu0 0.0
    %176 = vmatpush1.msra.mxu0 0.0
    %177 = vmatprep.subr.mxu0 0.0
    %178 = vmatpush1.msra.mxu0 0.0
    %179 = vmatprep.subr.mxu0 0.0
    %180 = vmatpush1.msra.mxu0 0.0
    %181 = vmatprep.subr.mxu0 0.0
    %182 = vmatpush1.msra.mxu0 0.0
    %183 = vmatprep.subr.mxu0 0.0
    %184 = vmatpush1.msra.mxu0 0.0
    %185 = vmatprep.subr.mxu0 0.0
    %186 = vmatpush1.msra.mxu0 0.0
    %187 = vmatprep.subr.mxu0 0.0
    %188 = vmatpush1.msra.mxu0 0.0
    %189 = vmatprep.subr.mxu0 0.0
    %190 = vmatpush1.msra.mxu0 0.0
    %191 = vmatprep.subr.mxu0 0.0
    %192 = vmatpush1.msra.mxu0 0.0
    %193 = vmatprep.subr.mxu0 0.0
    %194 = vmatpush1.msra.mxu0 0.0
    %195 = vmatprep.mubr.f32.mxu0 0.0
    %196 = vmatmul.mubr.f32.gmra.mrb[0].mxu0 %v76
    %v197 = vpop.f32.mrb[0].mxu0
    %v198 = vadd.f32 %v129, %v197
    %v199 = vpop.f32.mrb[0].mxu0
    %200 = vmatprep.mubr.f32.mxu0 0.0
    %201 = vmatmul.mubr.f32.gmra.mrb[0].mxu0 %v77
    %v202 = vpop.f32.mrb[0].mxu0
    %v203 = vadd.f32 %v129, %v202
    %v204 = vpop.f32.mrb[0].mxu0
    %205 = vmatprep.mubr.f32.mxu0 0.0
    %206 = vmatmul.mubr.f32.gmra.mrb[0].mxu0 %v78
    %v207 = vpop.f32.mrb[0].mxu0
    %v208 = vadd.f32 %v129, %v207
    %v209 = vpop.f32.mrb[0].mxu0
    %210 = vmatprep.mubr.f32.mxu0 0.0
    %211 = vmatmul.mubr.f32.gmra.mrb[0].mxu0 %v79
    %v212 = vpop.f32.mrb[0].mxu0
    %v213 = vadd.f32 %v129, %v212
    %v214 = vpop.f32.mrb[0].mxu0
    %215 = vmatprep.mubr.f32.mxu0 0.0
    %216 = vmatmul.mubr.f32.gmra.mrb[0].mxu0 %v80
    %v217 = vpop.f32.mrb[0].mxu0
    %v218 = vadd.f32 %v129, %v217
    %v219 = vpop.f32.mrb[0].mxu0
    %220 = vmatprep.mubr.f32.mxu0 0.0
    %221 = vmatmul.mubr.f32.gmra.mrb[0].mxu0 %v81
    %v222 = vpop.f32.mrb[0].mxu0
    %v223 = vadd.f32 %v129, %v222
    %v224 = vpop.f32.mrb[0].mxu0
    %225 = vmatprep.mubr.f32.mxu0 0.0
    %226 = vmatmul.mubr.f32.gmra.mrb[0].mxu0 %v82
    %v227 = vpop.f32.mrb[0].mxu0
    %v228 = vadd.f32 %v129, %v227
    %v229 = vpop.f32.mrb[0].mxu0
    %230 = vmatprep.mubr.f32.mxu0 0.0
    %231 = vmatmul.mubr.f32.gmra.mrb[0].mxu0 %v83
    %v232 = vpop.f32.mrb[0].mxu0
    %v233 = vadd.f32 %v129, %v232
    %v234 = vpop.f32.mrb[0].mxu0
    %235 = vmatprep.mubr.f32.mxu0 0.0
    %236 = vmatmul.mubr.f32.gmra.mrb[0].mxu0 %v84
    %v237 = vpop.f32.mrb[0].mxu0
    %v238 = vadd.f32 %v129, %v237
    %v239 = vpop.f32.mrb[0].mxu0
    %240 = vmatprep.mubr.f32.mxu0 0.0
    %241 = vmatmul.mubr.f32.gmra.mrb[0].mxu0 %v85
    %v242 = vpop.f32.mrb[0].mxu0
    %v243 = vadd.f32 %v129, %v242
    %v244 = vpop.f32.mrb[0].mxu0
    %245 = vmatprep.mubr.f32.mxu0 0.0
    %246 = vmatmul.mubr.f32.gmra.mrb[0].mxu0 %v86
    %v247 = vpop.f32.mrb[0].mxu0
    %v248 = vadd.f32 %v129, %v247
    %v249 = vpop.f32.mrb[0].mxu0
    %250 = vmatprep.mubr.f32.mxu0 0.0
    %251 = vmatmul.mubr.f32.gmra.mrb[0].mxu0 %v87
    %v252 = vpop.f32.mrb[0].mxu0
    %v253 = vadd.f32 %v129, %v252
    %v254 = vpop.f32.mrb[0].mxu0
    %255 = vmatprep.mubr.f32.mxu0 0.0
    %256 = vmatmul.mubr.f32.gmra.mrb[0].mxu0 %v88
    %v257 = vpop.f32.mrb[0].mxu0
    %v258 = vadd.f32 %v129, %v257
    %v259 = vpop.f32.mrb[0].mxu0
    %260 = vmatprep.mubr.f32.mxu0 0.0
    %261 = vmatmul.mubr.f32.gmra.mrb[0].mxu0 %v89
    %v262 = vpop.f32.mrb[0].mxu0
    %v263 = vadd.f32 %v129, %v262
    %v264 = vpop.f32.mrb[0].mxu0
    %265 = vmatprep.mubr.f32.mxu0 0.0
    %266 = vmatmul.mubr.f32.gmra.mrb[0].mxu0 %v90
    %v267 = vpop.f32.mrb[0].mxu0
    %v268 = vadd.f32 %v129, %v267
    %v269 = vpop.f32.mrb[0].mxu0
    %270 = vmatprep.mubr.f32.mxu0 0.0
    %271 = vmatmul.mubr.f32.gmra.mrb[0].mxu0 %v91
    %v272 = vpop.f32.mrb[0].mxu0
    %v273 = vadd.f32 %v129, %v272
    %v274 = vpop.f32.mrb[0].mxu0
    %275 = vmatprep.mubr.f32.mxu0 0.0
    %276 = vmatmul.mubr.f32.gmra.mrb[0].mxu0 %v92
    %v277 = vpop.f32.mrb[0].mxu0
    %v278 = vadd.f32 %v129, %v277
    %v279 = vpop.f32.mrb[0].mxu0
    %280 = vmatprep.mubr.f32.mxu0 0.0
    %281 = vmatmul.mubr.f32.gmra.mrb[0].mxu0 %v93
    %v282 = vpop.f32.mrb[0].mxu0
    %v283 = vadd.f32 %v129, %v282
    %v284 = vpop.f32.mrb[0].mxu0
    %285 = vmatprep.mubr.f32.mxu0 0.0
    %286 = vmatmul.mubr.f32.gmra.mrb[0].mxu0 %v94
    %v287 = vpop.f32.mrb[0].mxu0
    %v288 = vadd.f32 %v129, %v287
    %v289 = vpop.f32.mrb[0].mxu0
    %290 = vmatprep.mubr.f32.mxu0 0.0
    %291 = vmatmul.mubr.f32.gmra.mrb[0].mxu0 %v95
    %v292 = vpop.f32.mrb[0].mxu0
    %v293 = vadd.f32 %v129, %v292
    %v294 = vpop.f32.mrb[0].mxu0
    %295 = vmatprep.mubr.f32.mxu0 0.0
    %296 = vmatmul.mubr.f32.gmra.mrb[0].mxu0 %v96
    %v297 = vpop.f32.mrb[0].mxu0
    %v298 = vadd.f32 %v129, %v297
    %v299 = vpop.f32.mrb[0].mxu0
    %300 = vmatprep.mubr.f32.mxu0 0.0
    %301 = vmatmul.mubr.f32.gmra.mrb[0].mxu0 %v97
    %v302 = vpop.f32.mrb[0].mxu0
    %v303 = vadd.f32 %v129, %v302
    %v304 = vpop.f32.mrb[0].mxu0
    %305 = vmatprep.mubr.f32.mxu0 0.0
    %306 = vmatmul.mubr.f32.gmra.mrb[0].mxu0 %v98
    %v307 = vpop.f32.mrb[0].mxu0
    %v308 = vadd.f32 %v129, %v307
    %v309 = vpop.f32.mrb[0].mxu0
    %310 = vmatprep.mubr.f32.mxu0 0.0
    %311 = vmatmul.mubr.f32.gmra.mrb[0].mxu0 %v99
    %v312 = vpop.f32.mrb[0].mxu0
    %v313 = vadd.f32 %v129, %v312
    %v314 = vpop.f32.mrb[0].mxu0
    %315 = vmatprep.mubr.f32.mxu0 0.0
    %316 = vmatmul.mubr.f32.gmra.mrb[0].mxu0 %v100
    %v317 = vpop.f32.mrb[0].mxu0
    %v318 = vadd.f32 %v129, %v317
    %v319 = vpop.f32.mrb[0].mxu0
    %320 = vmatprep.mubr.f32.mxu0 0.0
    %321 = vmatmul.mubr.f32.gmra.mrb[0].mxu0 %v101
    %v322 = vpop.f32.mrb[0].mxu0
    %v323 = vadd.f32 %v129, %v322
    %v324 = vpop.f32.mrb[0].mxu0
    %325 = vmatprep.mubr.f32.mxu0 0.0
    %326 = vmatmul.mubr.f32.gmra.mrb[0].mxu0 %v102
    %v327 = vpop.f32.mrb[0].mxu0
    %v328 = vadd.f32 %v129, %v327
    %v329 = vpop.f32.mrb[0].mxu0
    %330 = vmatprep.mubr.f32.mxu0 0.0
    %331 = vmatmul.mubr.f32.gmra.mrb[0].mxu0 %v103
    %v332 = vpop.f32.mrb[0].mxu0
    %v333 = vadd.f32 %v129, %v332
    %v334 = vpop.f32.mrb[0].mxu0
    %335 = vmatprep.mubr.f32.mxu0 0.0
    %336 = vmatmul.mubr.f32.gmra.mrb[0].mxu0 %v104
    %v337 = vpop.f32.mrb[0].mxu0
    %v338 = vadd.f32 %v129, %v337
    %v339 = vpop.f32.mrb[0].mxu0
    %340 = vmatprep.mubr.f32.mxu0 0.0
    %341 = vmatmul.mubr.f32.gmra.mrb[0].mxu0 %v105
    %v342 = vpop.f32.mrb[0].mxu0
    %v343 = vadd.f32 %v129, %v342
    %v344 = vpop.f32.mrb[0].mxu0
    %345 = vmatprep.mubr.f32.mxu0 0.0
    %346 = vmatmul.mubr.f32.gmra.mrb[0].mxu0 %v106
    %v347 = vpop.f32.mrb[0].mxu0
    %v348 = vadd.f32 %v129, %v347
    %v349 = vpop.f32.mrb[0].mxu0
    %350 = vmatprep.mubr.f32.mxu0 0.0
    %351 = vmatmul.mubr.f32.gmra.mrb[0].mxu0 %v107
    %v352 = vpop.f32.mrb[0].mxu0
    %v353 = vadd.f32 %v129, %v352
    %v354 = vpop.f32.mrb[0].mxu0
    %355 = vdwg.mxu0
    %356 = vst [vmem:[#allocation10] sm:$0xff] %v198
    %357 = vst [vmem:[#allocation10 + $0x8] sm:$0xff] %v203
    %358 = vst [vmem:[#allocation10 + $0x10] sm:$0xff] %v208
    %359 = vst [vmem:[#allocation10 + $0x18] sm:$0xff] %v213
    %360 = vst [vmem:[#allocation10 + $0x20] sm:$0xff] %v218
    %361 = vst [vmem:[#allocation10 + $0x28] sm:$0xff] %v223
    %362 = vst [vmem:[#allocation10 + $0x30] sm:$0xff] %v228
    %363 = vst [vmem:[#allocation10 + $0x38] sm:$0xff] %v233
    %364 = vst [vmem:[#allocation10 + $0x40] sm:$0xff] %v238
    %365 = vst [vmem:[#allocation10 + $0x48] sm:$0xff] %v243
    %366 = vst [vmem:[#allocation10 + $0x50] sm:$0xff] %v248
    %367 = vst [vmem:[#allocation10 + $0x58] sm:$0xff] %v253
    %368 = vst [vmem:[#allocation10 + $0x60] sm:$0xff] %v258
    %369 = vst [vmem:[#allocation10 + $0x68] sm:$0xff] %v263
    %370 = vst [vmem:[#allocation10 + $0x70] sm:$0xff] %v268
    %371 = vst [vmem:[#allocation10 + $0x78] sm:$0xff] %v273
    %372 = vst [vmem:[#allocation10 + $0x80] sm:$0xff] %v278
    %373 = vst [vmem:[#allocation10 + $0x88] sm:$0xff] %v283
    %374 = vst [vmem:[#allocation10 + $0x90] sm:$0xff] %v288
    %375 = vst [vmem:[#allocation10 + $0x98] sm:$0xff] %v293
    %376 = vst [vmem:[#allocation10 + $0xa0] sm:$0xff] %v298
    %377 = vst [vmem:[#allocation10 + $0xa8] sm:$0xff] %v303
    %378 = vst [vmem:[#allocation10 + $0xb0] sm:$0xff] %v308
    %379 = vst [vmem:[#allocation10 + $0xb8] sm:$0xff] %v313
    %380 = vst [vmem:[#allocation10 + $0xc0] sm:$0xff] %v318
    %381 = vst [vmem:[#allocation10 + $0xc8] sm:$0xff] %v323
    %382 = vst [vmem:[#allocation10 + $0xd0] sm:$0xff] %v328
    %383 = vst [vmem:[#allocation10 + $0xd8] sm:$0xff] %v333
    %384 = vst [vmem:[#allocation10 + $0xe0] sm:$0xff] %v338
    %385 = vst [vmem:[#allocation10 + $0xe8] sm:$0xff] %v343
    %386 = vst [vmem:[#allocation10 + $0xf0] sm:$0xff] %v348
    %387 = vst [vmem:[#allocation10 + $0xf8] sm:$0xff] %v353
    %v388 = vld [vmem:[#allocation8] sm:$0xff]
    %v389 = vld [vmem:[#allocation8 + $0x8] sm:$0xff]
    %v390 = vld [vmem:[#allocation8 + $0x10] sm:$0xff]
    %v391 = vld [vmem:[#allocation8 + $0x18] sm:$0xff]
    %v392 = vld [vmem:[#allocation8 + $0x20] sm:$0xff]
    %v393 = vld [vmem:[#allocation8 + $0x28] sm:$0xff]
    %v394 = vld [vmem:[#allocation8 + $0x30] sm:$0xff]
    %v395 = vld [vmem:[#allocation8 + $0x38] sm:$0xff]
    %v396 = vld [vmem:[#allocation8 + $0x40] sm:$0xff]
    %v397 = vld [vmem:[#allocation8 + $0x48] sm:$0xff]
    %v398 = vld [vmem:[#allocation8 + $0x50] sm:$0xff]
    %v399 = vld [vmem:[#allocation8 + $0x58] sm:$0xff]
    %v400 = vld [vmem:[#allocation8 + $0x60] sm:$0xff]
    %v401 = vld [vmem:[#allocation8 + $0x68] sm:$0xff]
    %v402 = vld [vmem:[#allocation8 + $0x70] sm:$0xff]
    %v403 = vld [vmem:[#allocation8 + $0x78] sm:$0xff]
    %v404 = vld [vmem:[#allocation5] sm:$0xff]
    %v405 = vld [vmem:[#allocation5 + $0x8] sm:$0xff]
    %v406 = vld [vmem:[#allocation5 + $0x10] sm:$0xff]
    %v407 = vld [vmem:[#allocation5 + $0x18] sm:$0xff]
    %v408 = vld [vmem:[#allocation10] sm:$0xff]
    %v409 = vld [vmem:[#allocation10 + $0x8] sm:$0xff]
    %v410 = vld [vmem:[#allocation10 + $0x10] sm:$0xff]
    %v411 = vld [vmem:[#allocation10 + $0x18] sm:$0xff]
    %412 = vmatprep.subr.mxu0 0.0
    %413 = vmatpush1.msra.mxu0 %v388
    %414 = vmatprep.subr.mxu0 0.0
    %415 = vmatpush1.msra.mxu0 %v389
    %416 = vmatprep.subr.mxu0 0.0
    %417 = vmatpush1.msra.mxu0 %v390
    %418 = vmatprep.subr.mxu0 0.0
    %419 = vmatpush1.msra.mxu0 %v391
    %420 = vmatprep.subr.mxu0 0.0
    %421 = vmatpush1.msra.mxu0 %v392
    %422 = vmatprep.subr.mxu0 0.0
    %423 = vmatpush1.msra.mxu0 %v393
    %424 = vmatprep.subr.mxu0 0.0
    %425 = vmatpush1.msra.mxu0 %v394
    %426 = vmatprep.subr.mxu0 0.0
    %427 = vmatpush1.msra.mxu0 %v395
    %428 = vmatprep.subr.mxu0 0.0
    %429 = vmatpush1.msra.mxu0 %v396
    %430 = vmatprep.subr.mxu0 0.0
    %431 = vmatpush1.msra.mxu0 %v397
    %432 = vmatprep.subr.mxu0 0.0
    %433 = vmatpush1.msra.mxu0 %v398
    %434 = vmatprep.subr.mxu0 0.0
    %435 = vmatpush1.msra.mxu0 %v399
    %436 = vmatprep.subr.mxu0 0.0
    %437 = vmatpush1.msra.mxu0 %v400
    %438 = vmatprep.subr.mxu0 0.0
    %439 = vmatpush1.msra.mxu0 %v401
    %440 = vmatprep.subr.mxu0 0.0
    %441 = vmatpush1.msra.mxu0 %v402
    %442 = vmatprep.subr.mxu0 0.0
    %443 = vmatpush1.msra.mxu0 %v403
    %444 = vmatprep.subr.mxu0 0.0
    %445 = vmatpush1.msra.mxu0 0.0
    %446 = vmatprep.subr.mxu0 0.0
    %447 = vmatpush1.msra.mxu0 0.0
    %448 = vmatprep.subr.mxu0 0.0
    %449 = vmatpush1.msra.mxu0 0.0
    %450 = vmatprep.subr.mxu0 0.0
    %451 = vmatpush1.msra.mxu0 0.0
    %452 = vmatprep.subr.mxu0 0.0
    %453 = vmatpush1.msra.mxu0 0.0
    %454 = vmatprep.subr.mxu0 0.0
    %455 = vmatpush1.msra.mxu0 0.0
    %456 = vmatprep.subr.mxu0 0.0
    %457 = vmatpush1.msra.mxu0 0.0
    %458 = vmatprep.subr.mxu0 0.0
    %459 = vmatpush1.msra.mxu0 0.0
    %460 = vmatprep.subr.mxu0 0.0
    %461 = vmatpush1.msra.mxu0 0.0
    %462 = vmatprep.subr.mxu0 0.0
    %463 = vmatpush1.msra.mxu0 0.0
    %464 = vmatprep.subr.mxu0 0.0
    %465 = vmatpush1.msra.mxu0 0.0
    %466 = vmatprep.subr.mxu0 0.0
    %467 = vmatpush1.msra.mxu0 0.0
    %468 = vmatprep.subr.mxu0 0.0
    %469 = vmatpush1.msra.mxu0 0.0
    %470 = vmatprep.subr.mxu0 0.0
    %471 = vmatpush1.msra.mxu0 0.0
    %472 = vmatprep.subr.mxu0 0.0
    %473 = vmatpush1.msra.mxu0 0.0
    %474 = vmatprep.subr.mxu0 0.0
    %475 = vmatpush1.msra.mxu0 0.0
    %476 = vmatprep.mubr.f32.mxu0 0.0
    %477 = vmatmul.mubr.f32.gmra.mrb[0].mxu0 %v404
    %v478 = vpop.f32.mrb[0].mxu0
    %v479 = vadd.f32 0.0, %v478
    %v480 = vpop.f32.mrb[0].mxu0
    %481 = vmatprep.mubr.f32.mxu0 0.0
    %482 = vmatmul.mubr.f32.gmra.mrb[0].mxu0 %v405
    %v483 = vpop.f32.mrb[0].mxu0
    %v484 = vadd.f32 0.0, %v483
    %v485 = vpop.f32.mrb[0].mxu0
    %486 = vmatprep.mubr.f32.mxu0 0.0
    %487 = vmatmul.mubr.f32.gmra.mrb[0].mxu0 %v406
    %v488 = vpop.f32.mrb[0].mxu0
    %v489 = vadd.f32 0.0, %v488
    %v490 = vpop.f32.mrb[0].mxu0
    %491 = vmatprep.mubr.f32.mxu0 0.0
    %492 = vmatmul.mubr.f32.gmra.mrb[0].mxu0 %v407
    %v493 = vpop.f32.mrb[0].mxu0
    %v494 = vadd.f32 0.0, %v493
    %v495 = vpop.f32.mrb[0].mxu0
    %496 = vdwg.mxu0
    %v497 = vadd.f32 %v408, %v479
    %v498 = vadd.f32 %v409, %v484
    %v499 = vadd.f32 %v410, %v489
    %v500 = vadd.f32 %v411, %v494
    %v501 = vtanh.pop %v497
    %v502 = vtanh.pop %v498
    %v503 = vtanh.pop %v499
    %v504 = vtanh.pop %v500
    %505 = vst [vmem:[#allocation10] sm:$0xff] %v501
    %506 = vst [vmem:[#allocation10 + $0x8] sm:$0xff] %v502
    %507 = vst [vmem:[#allocation10 + $0x10] sm:$0xff] %v503
    %508 = vst [vmem:[#allocation10 + $0x18] sm:$0xff] %v504
    %v509 = vld [vmem:[#allocation10 + $0x20] sm:$0xff]
    %v510 = vld [vmem:[#allocation10 + $0x28] sm:$0xff]
    %v511 = vld [vmem:[#allocation10 + $0x30] sm:$0xff]
    %v512 = vld [vmem:[#allocation10 + $0x38] sm:$0xff]
    %513 = vmatprep.subr.mxu0 0.0
    %514 = vmatpush1.msra.mxu0 %v388
    %515 = vmatprep.subr.mxu0 0.0
    %516 = vmatpush1.msra.mxu0 %v389
    %517 = vmatprep.subr.mxu0 0.0
    %518 = vmatpush1.msra.mxu0 %v390
    %519 = vmatprep.subr.mxu0 0.0
    %520 = vmatpush1.msra.mxu0 %v391
    %521 = vmatprep.subr.mxu0 0.0
    %522 = vmatpush1.msra.mxu0 %v392
    %523 = vmatprep.subr.mxu0 0.0
    %524 = vmatpush1.msra.mxu0 %v393
    %525 = vmatprep.subr.mxu0 0.0
    %526 = vmatpush1.msra.mxu0 %v394
    %527 = vmatprep.subr.mxu0 0.0
    %528 = vmatpush1.msra.mxu0 %v395
    %529 = vmatprep.subr.mxu0 0.0
    %530 = vmatpush1.msra.mxu0 %v396
    %531 = vmatprep.subr.mxu0 0.0
    %532 = vmatpush1.msra.mxu0 %v397
    %533 = vmatprep.subr.mxu0 0.0
    %534 = vmatpush1.msra.mxu0 %v398
    %535 = vmatprep.subr.mxu0 0.0
    %536 = vmatpush1.msra.mxu0 %v399
    %537 = vmatprep.subr.mxu0 0.0
    %538 = vmatpush1.msra.mxu0 %v400
    %539 = vmatprep.subr.mxu0 0.0
    %540 = vmatpush1.msra.mxu0 %v401
    %541 = vmatprep.subr.mxu0 0.0
    %542 = vmatpush1.msra.mxu0 %v402
    %543 = vmatprep.subr.mxu0 0.0
    %544 = vmatpush1.msra.mxu0 %v403
    %545 = vmatprep.subr.mxu0 0.0
    %546 = vmatpush1.msra.mxu0 0.0
    %547 = vmatprep.subr.mxu0 0.0
    %548 = vmatpush1.msra.mxu0 0.0
    %549 = vmatprep.subr.mxu0 0.0
    %550 = vmatpush1.msra.mxu0 0.0
    %551 = vmatprep.subr.mxu0 0.0
    %552 = vmatpush1.msra.mxu0 0.0
    %553 = vmatprep.subr.mxu0 0.0
    %554 = vmatpush1.msra.mxu0 0.0
    %555 = vmatprep.subr.mxu0 0.0
    %556 = vmatpush1.msra.mxu0 0.0
    %557 = vmatprep.subr.mxu0 0.0
    %558 = vmatpush1.msra.mxu0 0.0
    %559 = vmatprep.subr.mxu0 0.0
    %560 = vmatpush1.msra.mxu0 0.0
    %561 = vmatprep.subr.mxu0 0.0
    %562 = vmatpush1.msra.mxu0 0.0
    %563 = vmatprep.subr.mxu0 0.0
    %564 = vmatpush1.msra.mxu0 0.0
    %565 = vmatprep.subr.mxu0 0.0
    %566 = vmatpush1.msra.mxu0 0.0
    %567 = vmatprep.subr.mxu0 0.0
    %568 = vmatpush1.msra.mxu0 0.0
    %569 = vmatprep.subr.mxu0 0.0
    %570 = vmatpush1.msra.mxu0 0.0
    %571 = vmatprep.subr.mxu0 0.0
    %572 = vmatpush1.msra.mxu0 0.0
    %573 = vmatprep.subr.mxu0 0.0
    %574 = vmatpush1.msra.mxu0 0.0
    %575 = vmatprep.subr.mxu0 0.0
    %576 = vmatpush1.msra.mxu0 0.0
    %577 = vmatprep.mubr.f32.mxu0 0.0
    %578 = vmatmul.mubr.f32.gmra.mrb[0].mxu0 %v501
    %v579 = vpop.f32.mrb[0].mxu0
    %v580 = vadd.f32 0.0, %v579
    %v581 = vpop.f32.mrb[0].mxu0
    %582 = vmatprep.mubr.f32.mxu0 0.0
    %583 = vmatmul.mubr.f32.gmra.mrb[0].mxu0 %v502
    %v584 = vpop.f32.mrb[0].mxu0
    %v585 = vadd.f32 0.0, %v584
    %v586 = vpop.f32.mrb[0].mxu0
    %587 = vmatprep.mubr.f32.mxu0 0.0
    %588 = vmatmul.mubr.f32.gmra.mrb[0].mxu0 %v503
    %v589 = vpop.f32.mrb[0].mxu0
    %v590 = vadd.f32 0.0, %v589
    %v591 = vpop.f32.mrb[0].mxu0
    %592 = vmatprep.mubr.f32.mxu0 0.0
    %593 = vmatmul.mubr.f32.gmra.mrb[0].mxu0 %v504
    %v594 = vpop.f32.mrb[0].mxu0
    %v595 = vadd.f32 0.0, %v594
    %v596 = vpop.f32.mrb[0].mxu0
    %597 = vdwg.mxu0
    %v598 = vadd.f32 %v509, %v580
    %v599 = vadd.f32 %v510, %v585
    %v600 = vadd.f32 %v511, %v590
    %v601 = vadd.f32 %v512, %v595
    %v602 = vtanh.pop %v598
    %v603 = vtanh.pop %v599
    %v604 = vtanh.pop %v600
    %v605 = vtanh.pop %v601
    %606 = vst [vmem:[#allocation10 + $0x20] sm:$0xff] %v602
    %607 = vst [vmem:[#allocation10 + $0x28] sm:$0xff] %v603
    %608 = vst [vmem:[#allocation10 + $0x30] sm:$0xff] %v604
    %609 = vst [vmem:[#allocation10 + $0x38] sm:$0xff] %v605
    %v610 = vld [vmem:[#allocation10 + $0x40] sm:$0xff]
    %v611 = vld [vmem:[#allocation10 + $0x48] sm:$0xff]
    %v612 = vld [vmem:[#allocation10 + $0x50] sm:$0xff]
    %v613 = vld [vmem:[#allocation10 + $0x58] sm:$0xff]
    %614 = vmatprep.subr.mxu0 0.0
    %615 = vmatpush1.msra.mxu0 %v388
    %616 = vmatprep.subr.mxu0 0.0
    %617 = vmatpush1.msra.mxu0 %v389
    %618 = vmatprep.subr.mxu0 0.0
    %619 = vmatpush1.msra.mxu0 %v390
    %620 = vmatprep.subr.mxu0 0.0
    %621 = vmatpush1.msra.mxu0 %v391
    %622 = vmatprep.subr.mxu0 0.0
    %623 = vmatpush1.msra.mxu0 %v392
    %624 = vmatprep.subr.mxu0 0.0
    %625 = vmatpush1.msra.mxu0 %v393
    %626 = vmatprep.subr.mxu0 0.0
    %627 = vmatpush1.msra.mxu0 %v394
    %628 = vmatprep.subr.mxu0 0.0
    %629 = vmatpush1.msra.mxu0 %v395
    %630 = vmatprep.subr.mxu0 0.0
    %631 = vmatpush1.msra.mxu0 %v396
    %632 = vmatprep.subr.mxu0 0.0
    %633 = vmatpush1.msra.mxu0 %v397
    %634 = vmatprep.subr.mxu0 0.0
    %635 = vmatpush1.msra.mxu0 %v398
    %636 = vmatprep.subr.mxu0 0.0
    %637 = vmatpush1.msra.mxu0 %v399
    %638 = vmatprep.subr.mxu0 0.0
    %639 = vmatpush1.msra.mxu0 %v400
    %640 = vmatprep.subr.mxu0 0.0
    %641 = vmatpush1.msra.mxu0 %v401
    %642 = vmatprep.subr.mxu0 0.0
    %643 = vmatpush1.msra.mxu0 %v402
    %644 = vmatprep.subr.mxu0 0.0
    %645 = vmatpush1.msra.mxu0 %v403
    %646 = vmatprep.subr.mxu0 0.0
    %647 = vmatpush1.msra.mxu0 0.0
    %648 = vmatprep.subr.mxu0 0.0
    %649 = vmatpush1.msra.mxu0 0.0
    %650 = vmatprep.subr.mxu0 0.0
    %651 = vmatpush1.msra.mxu0 0.0
    %652 = vmatprep.subr.mxu0 0.0
    %653 = vmatpush1.msra.mxu0 0.0
    %654 = vmatprep.subr.mxu0 0.0
    %655 = vmatpush1.msra.mxu0 0.0
    %656 = vmatprep.subr.mxu0 0.0
    %657 = vmatpush1.msra.mxu0 0.0
    %658 = vmatprep.subr.mxu0 0.0
    %659 = vmatpush1.msra.mxu0 0.0
    %660 = vmatprep.subr.mxu0 0.0
    %661 = vmatpush1.msra.mxu0 0.0
    %662 = vmatprep.subr.mxu0 0.0
    %663 = vmatpush1.msra.mxu0 0.0
    %664 = vmatprep.subr.mxu0 0.0
    %665 = vmatpush1.msra.mxu0 0.0
    %666 = vmatprep.subr.mxu0 0.0
    %667 = vmatpush1.msra.mxu0 0.0
    %668 = vmatprep.subr.mxu0 0.0
    %669 = vmatpush1.msra.mxu0 0.0
    %670 = vmatprep.subr.mxu0 0.0
    %671 = vmatpush1.msra.mxu0 0.0
    %672 = vmatprep.subr.mxu0 0.0
    %673 = vmatpush1.msra.mxu0 0.0
    %674 = vmatprep.subr.mxu0 0.0
    %675 = vmatpush1.msra.mxu0 0.0
    %676 = vmatprep.subr.mxu0 0.0
    %677 = vmatpush1.msra.mxu0 0.0
    %678 = vmatprep.mubr.f32.mxu0 0.0
    %679 = vmatmul.mubr.f32.gmra.mrb[0].mxu0 %v602
    %v680 = vpop.f32.mrb[0].mxu0
    %v681 = vadd.f32 0.0, %v680
    %v682 = vpop.f32.mrb[0].mxu0
    %683 = vmatprep.mubr.f32.mxu0 0.0
    %684 = vmatmul.mubr.f32.gmra.mrb[0].mxu0 %v603
    %v685 = vpop.f32.mrb[0].mxu0
    %v686 = vadd.f32 0.0, %v685
    %v687 = vpop.f32.mrb[0].mxu0
    %688 = vmatprep.mubr.f32.mxu0 0.0
    %689 = vmatmul.mubr.f32.gmra.mrb[0].mxu0 %v604
    %v690 = vpop.f32.mrb[0].mxu0
    %v691 = vadd.f32 0.0, %v690
    %v692 = vpop.f32.mrb[0].mxu0
    %693 = vmatprep.mubr.f32.mxu0 0.0
    %694 = vmatmul.mubr.f32.gmra.mrb[0].mxu0 %v605
    %v695 = vpop.f32.mrb[0].mxu0
    %v696 = vadd.f32 0.0, %v695
    %v697 = vpop.f32.mrb[0].mxu0
    %698 = vdwg.mxu0
    %v699 = vadd.f32 %v610, %v681
    %v700 = vadd.f32 %v611, %v686
    %v701 = vadd.f32 %v612, %v691
    %v702 = vadd.f32 %v613, %v696
    %v703 = vtanh.pop %v699
    %v704 = vtanh.pop %v700
    %v705 = vtanh.pop %v701
    %v706 = vtanh.pop %v702
    %707 = vst [vmem:[#allocation10 + $0x40] sm:$0xff] %v703
    %708 = vst [vmem:[#allocation10 + $0x48] sm:$0xff] %v704
    %709 = vst [vmem:[#allocation10 + $0x50] sm:$0xff] %v705
    %710 = vst [vmem:[#allocation10 + $0x58] sm:$0xff] %v706
    %v711 = vld [vmem:[#allocation10 + $0x60] sm:$0xff]
    %v712 = vld [vmem:[#allocation10 + $0x68] sm:$0xff]
    %v713 = vld [vmem:[#allocation10 + $0x70] sm:$0xff]
    %v714 = vld [vmem:[#allocation10 + $0x78] sm:$0xff]
    %715 = vmatprep.subr.mxu0 0.0
    %716 = vmatpush1.msra.mxu0 %v388
    %717 = vmatprep.subr.mxu0 0.0
    %718 = vmatpush1.msra.mxu0 %v389
    %719 = vmatprep.subr.mxu0 0.0
    %720 = vmatpush1.msra.mxu0 %v390
    %721 = vmatprep.subr.mxu0 0.0
    %722 = vmatpush1.msra.mxu0 %v391
    %723 = vmatprep.subr.mxu0 0.0
    %724 = vmatpush1.msra.mxu0 %v392
    %725 = vmatprep.subr.mxu0 0.0
    %726 = vmatpush1.msra.mxu0 %v393
    %727 = vmatprep.subr.mxu0 0.0
    %728 = vmatpush1.msra.mxu0 %v394
    %729 = vmatprep.subr.mxu0 0.0
    %730 = vmatpush1.msra.mxu0 %v395
    %731 = vmatprep.subr.mxu0 0.0
    %732 = vmatpush1.msra.mxu0 %v396
    %733 = vmatprep.subr.mxu0 0.0
    %734 = vmatpush1.msra.mxu0 %v397
    %735 = vmatprep.subr.mxu0 0.0
    %736 = vmatpush1.msra.mxu0 %v398
    %737 = vmatprep.subr.mxu0 0.0
    %738 = vmatpush1.msra.mxu0 %v399
    %739 = vmatprep.subr.mxu0 0.0
    %740 = vmatpush1.msra.mxu0 %v400
    %741 = vmatprep.subr.mxu0 0.0
    %742 = vmatpush1.msra.mxu0 %v401
    %743 = vmatprep.subr.mxu0 0.0
    %744 = vmatpush1.msra.mxu0 %v402
    %745 = vmatprep.subr.mxu0 0.0
    %746 = vmatpush1.msra.mxu0 %v403
    %747 = vmatprep.subr.mxu0 0.0
    %748 = vmatpush1.msra.mxu0 0.0
    %749 = vmatprep.subr.mxu0 0.0
    %750 = vmatpush1.msra.mxu0 0.0
    %751 = vmatprep.subr.mxu0 0.0
    %752 = vmatpush1.msra.mxu0 0.0
    %753 = vmatprep.subr.mxu0 0.0
    %754 = vmatpush1.msra.mxu0 0.0
    %755 = vmatprep.subr.mxu0 0.0
    %756 = vmatpush1.msra.mxu0 0.0
    %757 = vmatprep.subr.mxu0 0.0
    %758 = vmatpush1.msra.mxu0 0.0
    %759 = vmatprep.subr.mxu0 0.0
    %760 = vmatpush1.msra.mxu0 0.0
    %761 = vmatprep.subr.mxu0 0.0
    %762 = vmatpush1.msra.mxu0 0.0
    %763 = vmatprep.subr.mxu0 0.0
    %764 = vmatpush1.msra.mxu0 0.0
    %765 = vmatprep.subr.mxu0 0.0
    %766 = vmatpush1.msra.mxu0 0.0
    %767 = vmatprep.subr.mxu0 0.0
    %768 = vmatpush1.msra.mxu0 0.0
    %769 = vmatprep.subr.mxu0 0.0
    %770 = vmatpush1.msra.mxu0 0.0
    %771 = vmatprep.subr.mxu0 0.0
    %772 = vmatpush1.msra.mxu0 0.0
    %773 = vmatprep.subr.mxu0 0.0
    %774 = vmatpush1.msra.mxu0 0.0
    %775 = vmatprep.subr.mxu0 0.0
    %776 = vmatpush1.msra.mxu0 0.0
    %777 = vmatprep.subr.mxu0 0.0
    %778 = vmatpush1.msra.mxu0 0.0
    %779 = vmatprep.mubr.f32.mxu0 0.0
    %780 = vmatmul.mubr.f32.gmra.mrb[0].mxu0 %v703
    %v781 = vpop.f32.mrb[0].mxu0
    %v782 = vadd.f32 0.0, %v781
    %v783 = vpop.f32.mrb[0].mxu0
    %784 = vmatprep.mubr.f32.mxu0 0.0
    %785 = vmatmul.mubr.f32.gmra.mrb[0].mxu0 %v704
    %v786 = vpop.f32.mrb[0].mxu0
    %v787 = vadd.f32 0.0, %v786
    %v788 = vpop.f32.mrb[0].mxu0
    %789 = vmatprep.mubr.f32.mxu0 0.0
    %790 = vmatmul.mubr.f32.gmra.mrb[0].mxu0 %v705
    %v791 = vpop.f32.mrb[0].mxu0
    %v792 = vadd.f32 0.0, %v791
    %v793 = vpop.f32.mrb[0].mxu0
    %794 = vmatprep.mubr.f32.mxu0 0.0
    %795 = vmatmul.mubr.f32.gmra.mrb[0].mxu0 %v706
    %v796 = vpop.f32.mrb[0].mxu0
    %v797 = vadd.f32 0.0, %v796
    %v798 = vpop.f32.mrb[0].mxu0
    %799 = vdwg.mxu0
    %v800 = vadd.f32 %v711, %v782
    %v801 = vadd.f32 %v712, %v787
    %v802 = vadd.f32 %v713, %v792
    %v803 = vadd.f32 %v714, %v797
    %v804 = vtanh.pop %v800
    %v805 = vtanh.pop %v801
    %v806 = vtanh.pop %v802
    %v807 = vtanh.pop %v803
    %808 = vst [vmem:[#allocation10 + $0x60] sm:$0xff] %v804
    %809 = vst [vmem:[#allocation10 + $0x68] sm:$0xff] %v805
    %810 = vst [vmem:[#allocation10 + $0x70] sm:$0xff] %v806
    %811 = vst [vmem:[#allocation10 + $0x78] sm:$0xff] %v807
    %v812 = vld [vmem:[#allocation10 + $0x80] sm:$0xff]
    %v813 = vld [vmem:[#allocation10 + $0x88] sm:$0xff]
    %v814 = vld [vmem:[#allocation10 + $0x90] sm:$0xff]
    %v815 = vld [vmem:[#allocation10 + $0x98] sm:$0xff]
    %816 = vmatprep.subr.mxu0 0.0
    %817 = vmatpush1.msra.mxu0 %v388
    %818 = vmatprep.subr.mxu0 0.0
    %819 = vmatpush1.msra.mxu0 %v389
    %820 = vmatprep.subr.mxu0 0.0
    %821 = vmatpush1.msra.mxu0 %v390
    %822 = vmatprep.subr.mxu0 0.0
    %823 = vmatpush1.msra.mxu0 %v391
    %824 = vmatprep.subr.mxu0 0.0
    %825 = vmatpush1.msra.mxu0 %v392
    %826 = vmatprep.subr.mxu0 0.0
    %827 = vmatpush1.msra.mxu0 %v393
    %828 = vmatprep.subr.mxu0 0.0
    %829 = vmatpush1.msra.mxu0 %v394
    %830 = vmatprep.subr.mxu0 0.0
    %831 = vmatpush1.msra.mxu0 %v395
    %832 = vmatprep.subr.mxu0 0.0
    %833 = vmatpush1.msra.mxu0 %v396
    %834 = vmatprep.subr.mxu0 0.0
    %835 = vmatpush1.msra.mxu0 %v397
    %836 = vmatprep.subr.mxu0 0.0
    %837 = vmatpush1.msra.mxu0 %v398
    %838 = vmatprep.subr.mxu0 0.0
    %839 = vmatpush1.msra.mxu0 %v399
    %840 = vmatprep.subr.mxu0 0.0
    %841 = vmatpush1.msra.mxu0 %v400
    %842 = vmatprep.subr.mxu0 0.0
    %843 = vmatpush1.msra.mxu0 %v401
    %844 = vmatprep.subr.mxu0 0.0
    %845 = vmatpush1.msra.mxu0 %v402
    %846 = vmatprep.subr.mxu0 0.0
    %847 = vmatpush1.msra.mxu0 %v403
    %848 = vmatprep.subr.mxu0 0.0
    %849 = vmatpush1.msra.mxu0 0.0
    %850 = vmatprep.subr.mxu0 0.0
    %851 = vmatpush1.msra.mxu0 0.0
    %852 = vmatprep.subr.mxu0 0.0
    %853 = vmatpush1.msra.mxu0 0.0
    %854 = vmatprep.subr.mxu0 0.0
    %855 = vmatpush1.msra.mxu0 0.0
    %856 = vmatprep.subr.mxu0 0.0
    %857 = vmatpush1.msra.mxu0 0.0
    %858 = vmatprep.subr.mxu0 0.0
    %859 = vmatpush1.msra.mxu0 0.0
    %860 = vmatprep.subr.mxu0 0.0
    %861 = vmatpush1.msra.mxu0 0.0
    %862 = vmatprep.subr.mxu0 0.0
    %863 = vmatpush1.msra.mxu0 0.0
    %864 = vmatprep.subr.mxu0 0.0
    %865 = vmatpush1.msra.mxu0 0.0
    %866 = vmatprep.subr.mxu0 0.0
    %867 = vmatpush1.msra.mxu0 0.0
    %868 = vmatprep.subr.mxu0 0.0
    %869 = vmatpush1.msra.mxu0 0.0
    %870 = vmatprep.subr.mxu0 0.0
    %871 = vmatpush1.msra.mxu0 0.0
    %872 = vmatprep.subr.mxu0 0.0
    %873 = vmatpush1.msra.mxu0 0.0
    %874 = vmatprep.subr.mxu0 0.0
    %875 = vmatpush1.msra.mxu0 0.0
    %876 = vmatprep.subr.mxu0 0.0
    %877 = vmatpush1.msra.mxu0 0.0
    %878 = vmatprep.subr.mxu0 0.0
    %879 = vmatpush1.msra.mxu0 0.0
    %880 = vmatprep.mubr.f32.mxu0 0.0
    %881 = vmatmul.mubr.f32.gmra.mrb[0].mxu0 %v804
    %v882 = vpop.f32.mrb[0].mxu0
    %v883 = vadd.f32 0.0, %v882
    %v884 = vpop.f32.mrb[0].mxu0
    %885 = vmatprep.mubr.f32.mxu0 0.0
    %886 = vmatmul.mubr.f32.gmra.mrb[0].mxu0 %v805
    %v887 = vpop.f32.mrb[0].mxu0
    %v888 = vadd.f32 0.0, %v887
    %v889 = vpop.f32.mrb[0].mxu0
    %890 = vmatprep.mubr.f32.mxu0 0.0
    %891 = vmatmul.mubr.f32.gmra.mrb[0].mxu0 %v806
    %v892 = vpop.f32.mrb[0].mxu0
    %v893 = vadd.f32 0.0, %v892
    %v894 = vpop.f32.mrb[0].mxu0
    %895 = vmatprep.mubr.f32.mxu0 0.0
    %896 = vmatmul.mubr.f32.gmra.mrb[0].mxu0 %v807
    %v897 = vpop.f32.mrb[0].mxu0
    %v898 = vadd.f32 0.0, %v897
    %v899 = vpop.f32.mrb[0].mxu0
    %900 = vdwg.mxu0
    %v901 = vadd.f32 %v812, %v883
    %v902 = vadd.f32 %v813, %v888
    %v903 = vadd.f32 %v814, %v893
    %v904 = vadd.f32 %v815, %v898
    %v905 = vtanh.pop %v901
    %v906 = vtanh.pop %v902
    %v907 = vtanh.pop %v903
    %v908 = vtanh.pop %v904
    %909 = vst [vmem:[#allocation10 + $0x80] sm:$0xff] %v905
    %910 = vst [vmem:[#allocation10 + $0x88] sm:$0xff] %v906
    %911 = vst [vmem:[#allocation10 + $0x90] sm:$0xff] %v907
    %912 = vst [vmem:[#allocation10 + $0x98] sm:$0xff] %v908
    %v913 = vld [vmem:[#allocation10 + $0xa0] sm:$0xff]
    %v914 = vld [vmem:[#allocation10 + $0xa8] sm:$0xff]
    %v915 = vld [vmem:[#allocation10 + $0xb0] sm:$0xff]
    %v916 = vld [vmem:[#allocation10 + $0xb8] sm:$0xff]
    %917 = vmatprep.subr.mxu0 0.0
    %918 = vmatpush1.msra.mxu0 %v388
    %919 = vmatprep.subr.mxu0 0.0
    %920 = vmatpush1.msra.mxu0 %v389
    %921 = vmatprep.subr.mxu0 0.0
    %922 = vmatpush1.msra.mxu0 %v390
    %923 = vmatprep.subr.mxu0 0.0
    %924 = vmatpush1.msra.mxu0 %v391
    %925 = vmatprep.subr.mxu0 0.0
    %926 = vmatpush1.msra.mxu0 %v392
    %927 = vmatprep.subr.mxu0 0.0
    %928 = vmatpush1.msra.mxu0 %v393
    %929 = vmatprep.subr.mxu0 0.0
    %930 = vmatpush1.msra.mxu0 %v394
    %931 = vmatprep.subr.mxu0 0.0
    %932 = vmatpush1.msra.mxu0 %v395
    %933 = vmatprep.subr.mxu0 0.0
    %934 = vmatpush1.msra.mxu0 %v396
    %935 = vmatprep.subr.mxu0 0.0
    %936 = vmatpush1.msra.mxu0 %v397
    %937 = vmatprep.subr.mxu0 0.0
    %938 = vmatpush1.msra.mxu0 %v398
    %939 = vmatprep.subr.mxu0 0.0
    %940 = vmatpush1.msra.mxu0 %v399
    %941 = vmatprep.subr.mxu0 0.0
    %942 = vmatpush1.msra.mxu0 %v400
    %943 = vmatprep.subr.mxu0 0.0
    %944 = vmatpush1.msra.mxu0 %v401
    %945 = vmatprep.subr.mxu0 0.0
    %946 = vmatpush1.msra.mxu0 %v402
    %947 = vmatprep.subr.mxu0 0.0
    %948 = vmatpush1.msra.mxu0 %v403
    %949 = vmatprep.subr.mxu0 0.0
    %950 = vmatpush1.msra.mxu0 0.0
    %951 = vmatprep.subr.mxu0 0.0
    %952 = vmatpush1.msra.mxu0 0.0
    %953 = vmatprep.subr.mxu0 0.0
    %954 = vmatpush1.msra.mxu0 0.0
    %955 = vmatprep.subr.mxu0 0.0
    %956 = vmatpush1.msra.mxu0 0.0
    %957 = vmatprep.subr.mxu0 0.0
    %958 = vmatpush1.msra.mxu0 0.0
    %959 = vmatprep.subr.mxu0 0.0
    %960 = vmatpush1.msra.mxu0 0.0
    %961 = vmatprep.subr.mxu0 0.0
    %962 = vmatpush1.msra.mxu0 0.0
    %963 = vmatprep.subr.mxu0 0.0
    %964 = vmatpush1.msra.mxu0 0.0
    %965 = vmatprep.subr.mxu0 0.0
    %966 = vmatpush1.msra.mxu0 0.0
    %967 = vmatprep.subr.mxu0 0.0
    %968 = vmatpush1.msra.mxu0 0.0
    %969 = vmatprep.subr.mxu0 0.0
    %970 = vmatpush1.msra.mxu0 0.0
    %971 = vmatprep.subr.mxu0 0.0
    %972 = vmatpush1.msra.mxu0 0.0
    %973 = vmatprep.subr.mxu0 0.0
    %974 = vmatpush1.msra.mxu0 0.0
    %975 = vmatprep.subr.mxu0 0.0
    %976 = vmatpush1.msra.mxu0 0.0
    %977 = vmatprep.subr.mxu0 0.0
    %978 = vmatpush1.msra.mxu0 0.0
    %979 = vmatprep.subr.mxu0 0.0
    %980 = vmatpush1.msra.mxu0 0.0
    %981 = vmatprep.mubr.f32.mxu0 0.0
    %982 = vmatmul.mubr.f32.gmra.mrb[0].mxu0 %v905
    %v983 = vpop.f32.mrb[0].mxu0
    %v984 = vadd.f32 0.0, %v983
    %v985 = vpop.f32.mrb[0].mxu0
    %986 = vmatprep.mubr.f32.mxu0 0.0
    %987 = vmatmul.mubr.f32.gmra.mrb[0].mxu0 %v906
    %v988 = vpop.f32.mrb[0].mxu0
    %v989 = vadd.f32 0.0, %v988
    %v990 = vpop.f32.mrb[0].mxu0
    %991 = vmatprep.mubr.f32.mxu0 0.0
    %992 = vmatmul.mubr.f32.gmra.mrb[0].mxu0 %v907
    %v993 = vpop.f32.mrb[0].mxu0
    %v994 = vadd.f32 0.0, %v993
    %v995 = vpop.f32.mrb[0].mxu0
    %996 = vmatprep.mubr.f32.mxu0 0.0
    %997 = vmatmul.mubr.f32.gmra.mrb[0].mxu0 %v908
    %v998 = vpop.f32.mrb[0].mxu0
    %v999 = vadd.f32 0.0, %v998
    %v1000 = vpop.f32.mrb[0].mxu0
    %1001 = vdwg.mxu0
    %v1002 = vadd.f32 %v913, %v984
    %v1003 = vadd.f32 %v914, %v989
    %v1004 = vadd.f32 %v915, %v994
    %v1005 = vadd.f32 %v916, %v999
    %v1006 = vtanh.pop %v1002
    %v1007 = vtanh.pop %v1003
    %v1008 = vtanh.pop %v1004
    %v1009 = vtanh.pop %v1005
    %1010 = vst [vmem:[#allocation10 + $0xa0] sm:$0xff] %v1006
    %1011 = vst [vmem:[#allocation10 + $0xa8] sm:$0xff] %v1007
    %1012 = vst [vmem:[#allocation10 + $0xb0] sm:$0xff] %v1008
    %1013 = vst [vmem:[#allocation10 + $0xb8] sm:$0xff] %v1009
    %v1014 = vld [vmem:[#allocation10 + $0xc0] sm:$0xff]
    %v1015 = vld [vmem:[#allocation10 + $0xc8] sm:$0xff]
    %v1016 = vld [vmem:[#allocation10 + $0xd0] sm:$0xff]
    %v1017 = vld [vmem:[#allocation10 + $0xd8] sm:$0xff]
    %1018 = vmatprep.subr.mxu0 0.0
    %1019 = vmatpush1.msra.mxu0 %v388
    %1020 = vmatprep.subr.mxu0 0.0
    %1021 = vmatpush1.msra.mxu0 %v389
    %1022 = vmatprep.subr.mxu0 0.0
    %1023 = vmatpush1.msra.mxu0 %v390
    %1024 = vmatprep.subr.mxu0 0.0
    %1025 = vmatpush1.msra.mxu0 %v391
    %1026 = vmatprep.subr.mxu0 0.0
    %1027 = vmatpush1.msra.mxu0 %v392
    %1028 = vmatprep.subr.mxu0 0.0
    %1029 = vmatpush1.msra.mxu0 %v393
    %1030 = vmatprep.subr.mxu0 0.0
    %1031 = vmatpush1.msra.mxu0 %v394
    %1032 = vmatprep.subr.mxu0 0.0
    %1033 = vmatpush1.msra.mxu0 %v395
    %1034 = vmatprep.subr.mxu0 0.0
    %1035 = vmatpush1.msra.mxu0 %v396
    %1036 = vmatprep.subr.mxu0 0.0
    %1037 = vmatpush1.msra.mxu0 %v397
    %1038 = vmatprep.subr.mxu0 0.0
    %1039 = vmatpush1.msra.mxu0 %v398
    %1040 = vmatprep.subr.mxu0 0.0
    %1041 = vmatpush1.msra.mxu0 %v399
    %1042 = vmatprep.subr.mxu0 0.0
    %1043 = vmatpush1.msra.mxu0 %v400
    %1044 = vmatprep.subr.mxu0 0.0
    %1045 = vmatpush1.msra.mxu0 %v401
    %1046 = vmatprep.subr.mxu0 0.0
    %1047 = vmatpush1.msra.mxu0 %v402
    %1048 = vmatprep.subr.mxu0 0.0
    %1049 = vmatpush1.msra.mxu0 %v403
    %1050 = vmatprep.subr.mxu0 0.0
    %1051 = vmatpush1.msra.mxu0 0.0
    %1052 = vmatprep.subr.mxu0 0.0
    %1053 = vmatpush1.msra.mxu0 0.0
    %1054 = vmatprep.subr.mxu0 0.0
    %1055 = vmatpush1.msra.mxu0 0.0
    %1056 = vmatprep.subr.mxu0 0.0
    %1057 = vmatpush1.msra.mxu0 0.0
    %1058 = vmatprep.subr.mxu0 0.0
    %1059 = vmatpush1.msra.mxu0 0.0
    %1060 = vmatprep.subr.mxu0 0.0
    %1061 = vmatpush1.msra.mxu0 0.0
    %1062 = vmatprep.subr.mxu0 0.0
    %1063 = vmatpush1.msra.mxu0 0.0
    %1064 = vmatprep.subr.mxu0 0.0
    %1065 = vmatpush1.msra.mxu0 0.0
    %1066 = vmatprep.subr.mxu0 0.0
    %1067 = vmatpush1.msra.mxu0 0.0
    %1068 = vmatprep.subr.mxu0 0.0
    %1069 = vmatpush1.msra.mxu0 0.0
    %1070 = vmatprep.subr.mxu0 0.0
    %1071 = vmatpush1.msra.mxu0 0.0
    %1072 = vmatprep.subr.mxu0 0.0
    %1073 = vmatpush1.msra.mxu0 0.0
    %1074 = vmatprep.subr.mxu0 0.0
    %1075 = vmatpush1.msra.mxu0 0.0
    %1076 = vmatprep.subr.mxu0 0.0
    %1077 = vmatpush1.msra.mxu0 0.0
    %1078 = vmatprep.subr.mxu0 0.0
    %1079 = vmatpush1.msra.mxu0 0.0
    %1080 = vmatprep.subr.mxu0 0.0
    %1081 = vmatpush1.msra.mxu0 0.0
    %1082 = vmatprep.mubr.f32.mxu0 0.0
    %1083 = vmatmul.mubr.f32.gmra.mrb[0].mxu0 %v1006
    %v1084 = vpop.f32.mrb[0].mxu0
    %v1085 = vadd.f32 0.0, %v1084
    %v1086 = vpop.f32.mrb[0].mxu0
    %1087 = vmatprep.mubr.f32.mxu0 0.0
    %1088 = vmatmul.mubr.f32.gmra.mrb[0].mxu0 %v1007
    %v1089 = vpop.f32.mrb[0].mxu0
    %v1090 = vadd.f32 0.0, %v1089
    %v1091 = vpop.f32.mrb[0].mxu0
    %1092 = vmatprep.mubr.f32.mxu0 0.0
    %1093 = vmatmul.mubr.f32.gmra.mrb[0].mxu0 %v1008
    %v1094 = vpop.f32.mrb[0].mxu0
    %v1095 = vadd.f32 0.0, %v1094
    %v1096 = vpop.f32.mrb[0].mxu0
    %1097 = vmatprep.mubr.f32.mxu0 0.0
    %1098 = vmatmul.mubr.f32.gmra.mrb[0].mxu0 %v1009
    %v1099 = vpop.f32.mrb[0].mxu0
    %v1100 = vadd.f32 0.0, %v1099
    %v1101 = vpop.f32.mrb[0].mxu0
    %1102 = vdwg.mxu0
    %v1103 = vadd.f32 %v1014, %v1085
    %v1104 = vadd.f32 %v1015, %v1090
    %v1105 = vadd.f32 %v1016, %v1095
    %v1106 = vadd.f32 %v1017, %v1100
    %v1107 = vtanh.pop %v1103
    %v1108 = vtanh.pop %v1104
    %v1109 = vtanh.pop %v1105
    %v1110 = vtanh.pop %v1106
    %1111 = vst [vmem:[#allocation10 + $0xc0] sm:$0xff] %v1107
    %1112 = vst [vmem:[#allocation10 + $0xc8] sm:$0xff] %v1108
    %1113 = vst [vmem:[#allocation10 + $0xd0] sm:$0xff] %v1109
    %1114 = vst [vmem:[#allocation10 + $0xd8] sm:$0xff] %v1110
    %v1115 = vld [vmem:[#allocation10 + $0xe0] sm:$0xff]
    %v1116 = vld [vmem:[#allocation10 + $0xe8] sm:$0xff]
    %v1117 = vld [vmem:[#allocation10 + $0xf0] sm:$0xff]
    %v1118 = vld [vmem:[#allocation10 + $0xf8] sm:$0xff]
    %1119 = vmatprep.subr.mxu0 0.0
    %1120 = vmatpush1.msra.mxu0 %v388
    %1121 = vmatprep.subr.mxu0 0.0
    %1122 = vmatpush1.msra.mxu0 %v389
    %1123 = vmatprep.subr.mxu0 0.0
    %1124 = vmatpush1.msra.mxu0 %v390
    %1125 = vmatprep.subr.mxu0 0.0
    %1126 = vmatpush1.msra.mxu0 %v391
    %1127 = vmatprep.subr.mxu0 0.0
    %1128 = vmatpush1.msra.mxu0 %v392
    %1129 = vmatprep.subr.mxu0 0.0
    %1130 = vmatpush1.msra.mxu0 %v393
    %1131 = vmatprep.subr.mxu0 0.0
    %1132 = vmatpush1.msra.mxu0 %v394
    %1133 = vmatprep.subr.mxu0 0.0
    %1134 = vmatpush1.msra.mxu0 %v395
    %1135 = vmatprep.subr.mxu0 0.0
    %1136 = vmatpush1.msra.mxu0 %v396
    %1137 = vmatprep.subr.mxu0 0.0
    %1138 = vmatpush1.msra.mxu0 %v397
    %1139 = vmatprep.subr.mxu0 0.0
    %1140 = vmatpush1.msra.mxu0 %v398
    %1141 = vmatprep.subr.mxu0 0.0
    %1142 = vmatpush1.msra.mxu0 %v399
    %1143 = vmatprep.subr.mxu0 0.0
    %1144 = vmatpush1.msra.mxu0 %v400
    %1145 = vmatprep.subr.mxu0 0.0
    %1146 = vmatpush1.msra.mxu0 %v401
    %1147 = vmatprep.subr.mxu0 0.0
    %1148 = vmatpush1.msra.mxu0 %v402
    %1149 = vmatprep.subr.mxu0 0.0
    %1150 = vmatpush1.msra.mxu0 %v403
    %1151 = vmatprep.subr.mxu0 0.0
    %1152 = vmatpush1.msra.mxu0 0.0
    %1153 = vmatprep.subr.mxu0 0.0
    %1154 = vmatpush1.msra.mxu0 0.0
    %1155 = vmatprep.subr.mxu0 0.0
    %1156 = vmatpush1.msra.mxu0 0.0
    %1157 = vmatprep.subr.mxu0 0.0
    %1158 = vmatpush1.msra.mxu0 0.0
    %1159 = vmatprep.subr.mxu0 0.0
    %1160 = vmatpush1.msra.mxu0 0.0
    %1161 = vmatprep.subr.mxu0 0.0
    %1162 = vmatpush1.msra.mxu0 0.0
    %1163 = vmatprep.subr.mxu0 0.0
    %1164 = vmatpush1.msra.mxu0 0.0
    %1165 = vmatprep.subr.mxu0 0.0
    %1166 = vmatpush1.msra.mxu0 0.0
    %1167 = vmatprep.subr.mxu0 0.0
    %1168 = vmatpush1.msra.mxu0 0.0
    %1169 = vmatprep.subr.mxu0 0.0
    %1170 = vmatpush1.msra.mxu0 0.0
    %1171 = vmatprep.subr.mxu0 0.0
    %1172 = vmatpush1.msra.mxu0 0.0
    %1173 = vmatprep.subr.mxu0 0.0
    %1174 = vmatpush1.msra.mxu0 0.0
    %1175 = vmatprep.subr.mxu0 0.0
    %1176 = vmatpush1.msra.mxu0 0.0
    %1177 = vmatprep.subr.mxu0 0.0
    %1178 = vmatpush1.msra.mxu0 0.0
    %1179 = vmatprep.subr.mxu0 0.0
    %1180 = vmatpush1.msra.mxu0 0.0
    %1181 = vmatprep.subr.mxu0 0.0
    %1182 = vmatpush1.msra.mxu0 0.0
    %1183 = vmatprep.mubr.f32.mxu0 0.0
    %1184 = vmatmul.mubr.f32.gmra.mrb[0].mxu0 %v1107
    %v1185 = vpop.f32.mrb[0].mxu0
    %v1186 = vadd.f32 0.0, %v1185
    %v1187 = vpop.f32.mrb[0].mxu0
    %1188 = vmatprep.mubr.f32.mxu0 0.0
    %1189 = vmatmul.mubr.f32.gmra.mrb[0].mxu0 %v1108
    %v1190 = vpop.f32.mrb[0].mxu0
    %v1191 = vadd.f32 0.0, %v1190
    %v1192 = vpop.f32.mrb[0].mxu0
    %1193 = vmatprep.mubr.f32.mxu0 0.0
    %1194 = vmatmul.mubr.f32.gmra.mrb[0].mxu0 %v1109
    %v1195 = vpop.f32.mrb[0].mxu0
    %v1196 = vadd.f32 0.0, %v1195
    %v1197 = vpop.f32.mrb[0].mxu0
    %1198 = vmatprep.mubr.f32.mxu0 0.0
    %1199 = vmatmul.mubr.f32.gmra.mrb[0].mxu0 %v1110
    %v1200 = vpop.f32.mrb[0].mxu0
    %v1201 = vadd.f32 0.0, %v1200
    %v1202 = vpop.f32.mrb[0].mxu0
    %1203 = vdwg.mxu0
    %v1204 = vadd.f32 %v1115, %v1186
    %v1205 = vadd.f32 %v1116, %v1191
    %v1206 = vadd.f32 %v1117, %v1196
    %v1207 = vadd.f32 %v1118, %v1201
    %v1208 = vtanh.pop %v1204
    %v1209 = vtanh.pop %v1205
    %v1210 = vtanh.pop %v1206
    %v1211 = vtanh.pop %v1207
    %1212 = vst [vmem:[#allocation10 + $0xe0] sm:$0xff] %v1208
    %1213 = vst [vmem:[#allocation10 + $0xe8] sm:$0xff] %v1209
    %1214 = vst [vmem:[#allocation10 + $0xf0] sm:$0xff] %v1210
    %1215 = vst [vmem:[#allocation10 + $0xf8] sm:$0xff] %v1211
    // Predicated region
    $region38: #{tpu_custom_call.1} parent=1 // pred_check
      _
    $region39: #{tpu_custom_call.1} parent=1 // pred_check_branch
      %1217 = sbr.rel (0) target = $region41
    $region40: #{tpu_custom_call.1} parent=1 // pred_region
      %s1219 = ssub.s32 4096, 4096
      %1220 = vsyncadd [#allocation4], %s1219
      %s1221 = sshll.u32 [#allocation10], 4
      %s1222 = int_to_ptr.vmem [resolvable:$true] %s1221
      %1227 = dma.vmem_to_hbm [thread:$0]  %s1222, 4096, %s5, [#allocation4], 128, 128, 8
    $region41: #{tpu_custom_call.1} parent=1 // pred_fallthru
      _
    // Predicated region
    $region42: #{tpu_custom_call.1} parent=1 // pred_check
      _
    $region43: #{tpu_custom_call.1} parent=1 // pred_check_branch
      %1229 = sbr.rel (0) target = $region45
    $region44: #{tpu_custom_call.1} parent=1 // pred_region
      %1230 = dma.done [#allocation4], 4096
    $region45: #{tpu_custom_call.1} parent=1 // pred_fallthru
      _
    %1231 = vsyncpa [#allocation3], 1
    %1232 = vsyncpa [#allocation6], 1
    %1233 = vsyncpa [#allocation9], 1
    %1234 = vsyncpa [#allocation4], 1

</llo_original>
